<compile_context>
chip_gen: v7x
topology: tpu7x:2x2x1
jax: 0.10.0
libtpu: 0.0.40
codegen_flags: <defaults>
</compile_context>

<pallas_src>
import numpy as np
import jax
import jax.numpy as jnp
from jax.experimental import pallas as pl
from jax.experimental.pallas import tpu as pltpu


# -----------------------------------------------------------------------------
# Static geometry (host-side numpy, copied verbatim from the PyTorch module)
# -----------------------------------------------------------------------------
H_IN = W_IN = 13
H_OUT = W_OUT = 7
P_IN = H_IN * W_IN      # 169
P_OUT = H_OUT * W_OUT   # 49

K_PAD = 256             # contraction dim padded (169 -> 256): (8,128)-aligned
N_PAD = 128             # output lane dim padded (49 -> 128): unmasked stores
TILE_R = 128            # B*C rows per grid step

_BASE = np.array(
    [[1, 0], [3, 0], [5, 0], [7, 0], [9, 0], [11, 0],
     [0, 2], [2, 2], [4, 2], [6, 2], [8, 2], [10, 2], [12, 2],
     [1, 4], [3, 4], [5, 4], [7, 4], [9, 4], [11, 4],
     [2, 6], [4, 6], [6, 6], [8, 6], [10, 6],
     [3, 8], [5, 8], [7, 8], [9, 8],
     [4, 10], [6, 10], [8, 10],
     [5, 12], [7, 12]], dtype=np.int64)


def _build_pool_operator():
    """Dense (K_PAD, N_PAD) f32 operator implementing first_pooling.forward."""
    bx, by = _BASE[:, 0], _BASE[:, 1]
    bxm = np.maximum(bx - 1, 0)
    bxp = np.minimum(bx + 1, H_IN - 1)
    bym = np.maximum(by - 1, 0)
    byp = np.minimum(by + 1, W_IN - 1)
    # mapto_refine3 (same order of ops as the PyTorch module)
    m1 = by // 2
    m0 = bx // 2 + (m1 + 1) % 2
    tgt = m0 * W_OUT + m1                       # flat index into the 7x7 output

    M = np.zeros((K_PAD, N_PAD), dtype=np.float32)
    srcs = [(bx, by), (bxm, by), (bxp, by), (bx, byp), (bx, bym),
            (bxm, byp), (bxm, bym)]             # the 7 averaged hex neighbours
    for sx, sy in srcs:
        for i in range(len(_BASE)):
            M[sx[i] * W_IN + sy[i], tgt[i]] += 1.0 / 7.0
    return M


_POOL_OP = jnp.asarray(_build_pool_operator())  # (256, 128) f32, < 128 KiB


# -----------------------------------------------------------------------------
# Pallas kernel: one MXU matmul per row tile, lane-dense (128-wide) output
# -----------------------------------------------------------------------------
def _pool_kernel(x_ref, m_ref, o_ref):
    o_ref[...] = jnp.dot(x_ref[...], m_ref[...],
                         preferred_element_type=jnp.float32)


@jax.jit
def first_pooling(x):
    """x: (B, C, 13, 13) float -> (B, C, 7, 7) float32 (PyTorch first_pooling)."""
    B, C, H, W = x.shape
    assert (H, W) == (H_IN, W_IN)
    R = B * C
    R_pad = ((R + TILE_R - 1) // TILE_R) * TILE_R

    # Layout plumbing only (no compute): flatten NCHW spatial dims and zero-pad
    # rows/contraction so every block is (8,128)-aligned.
    xf = x.reshape(R, P_IN).astype(jnp.float32)
    xf = jnp.pad(xf, ((0, R_pad - R), (0, K_PAD - P_IN)))

    out = pl.pallas_call(
        _pool_kernel,
        out_shape=jax.ShapeDtypeStruct((R_pad, N_PAD), jnp.float32),
        grid=(R_pad // TILE_R,),
        in_specs=[pl.BlockSpec((TILE_R, K_PAD), lambda i: (i, 0)),
                  pl.BlockSpec((K_PAD, N_PAD), lambda i: (0, 0))],
        out_specs=pl.BlockSpec((TILE_R, N_PAD), lambda i: (i, 0)),
        compiler_params=pltpu.CompilerParams(
            dimension_semantics=("parallel",)),
    )(xf, _POOL_OP)

    return out[:R, :P_OUT].reshape(B, C, H_OUT, W_OUT)


# -----------------------------------------------------------------------------
# Pure-JAX reference mirroring the PyTorch forward (for correctness check)
# -----------------------------------------------------------------------------
def _first_pooling_ref(x):
    bx, by = _BASE[:, 0], _BASE[:, 1]
    bxm = np.maximum(bx - 1, 0)
    bxp = np.minimum(bx + 1, H_IN - 1)
    bym = np.maximum(by - 1, 0)
    byp = np.minimum(by + 1, W_IN - 1)
    m1 = by // 2
    m0 = bx // 2 + (m1 + 1) % 2
    tmp = (x[:, :, bx, by] + x[:, :, bxm, by] + x[:, :, bxp, by] +
           x[:, :, bx, byp] + x[:, :, bx, bym] +
           x[:, :, bxm, byp] + x[:, :, bxm, bym]) * (1.0 / 7.0)
    out = jnp.zeros((x.shape[0], x.shape[1], H_OUT, W_OUT), jnp.float32)
    return out.at[:, :, m0, m1].set(tmp)


if __name__ == "__main__":
    key = jax.random.PRNGKey(0)
    # first_pooling sits after hexconv1 in the autoencoder: (B=2, C=16, 13, 13)
    x = jax.random.normal(key, (2, 16, 13, 13), jnp.float32)

    y = first_pooling(x)
    jax.block_until_ready(y)

    assert y.shape == (2, 16, 7, 7) and y.dtype == jnp.float32
    y_ref = _first_pooling_ref(x)
    assert jnp.allclose(y, y_ref, rtol=1e-5, atol=1e-5), \
        float(jnp.max(jnp.abs(y - y_ref)))
    print("KERNEL_OK")
</pallas_src>

<mosaic_0001>
module attributes {stable_mosaic.version = 11 : i64} {
  func.func @_pool_kernel(%arg0: i32, %arg1: memref<128x256xf32, #tpu.memory_space<vmem>>, %arg2: memref<256x128xf32, #tpu.memory_space<vmem>>, %arg3: memref<128x128xf32, #tpu.memory_space<vmem>>) attributes {dimension_semantics = [#tpu.dimension_semantics<parallel>], iteration_bounds = array<i64: 1>, scalar_prefetch = 0 : i64, scratch_operands = 0 : i64, tpu.core_type = #tpu.core_type<tc>, window_params = [{transform_indices = @transform_0, window_bounds = array<i64: 128, 256>}, {pipeline_mode = #tpu.pipeline_mode<synchronous>, transform_indices = @transform_1, window_bounds = array<i64: 256, 128>}, {transform_indices = @transform_2, window_bounds = array<i64: 128, 128>}]} {
    %c0 = arith.constant 0 : index
    %c0_0 = arith.constant 0 : index
    %0 = vector.load %arg1[%c0, %c0_0] : memref<128x256xf32, #tpu.memory_space<vmem>>, vector<128x256xf32>
    %c0_1 = arith.constant 0 : index
    %c0_2 = arith.constant 0 : index
    %1 = vector.load %arg2[%c0_1, %c0_2] : memref<256x128xf32, #tpu.memory_space<vmem>>, vector<256x128xf32>
    %cst = arith.constant dense<0.000000e+00> : vector<128x128xf32>
    %2 = tpu.matmul %0, %1, %cst {dimension_numbers = #tpu.dot_dimension_numbers<[1], [0], [0], [1], [0, 0, 1, 1], [], []>} : vector<128x256xf32>, vector<256x128xf32>, vector<128x128xf32> -> vector<128x128xf32>
    %c0_3 = arith.constant 0 : index
    %c0_4 = arith.constant 0 : index
    %3 = vector.load %arg3[%c0_3, %c0_4] : memref<128x128xf32, #tpu.memory_space<vmem>>, vector<128x128xf32>
    tpu.vector_store %arg3[%c0_3, %c0_4], %2 {strides = array<i32>} : memref<128x128xf32, #tpu.memory_space<vmem>>, vector<128x128xf32>,
    return
  }
  func.func @transform_0(%arg0: i32) -> (i32, i32) {
    %c0_i32 = arith.constant 0 : i32
    %c0_i32_0 = arith.constant 0 : i32
    return %arg0, %c0_i32 : i32, i32
  }
  func.func @transform_1(%arg0: i32) -> (i32, i32) {
    %c0_i32 = arith.constant 0 : i32
    %c0_i32_0 = arith.constant 0 : i32
    %c0_i32_1 = arith.constant 0 : i32
    return %c0_i32, %c0_i32_0 : i32, i32
  }
  func.func @transform_2(%arg0: i32) -> (i32, i32) {
    %c0_i32 = arith.constant 0 : i32
    %c0_i32_0 = arith.constant 0 : i32
    return %arg0, %c0_i32 : i32, i32
  }
}

</mosaic_0001>

<llo_original>
// kernel: first_pooling.1
$region0: #{first_pooling.1}
  #allocation0 [shape = 'u32[]', space=smem, size = 0x4, offset = 0x4, fixed_abs, tag = 'smem constant byte address 0x4 - core index']
  #allocation1 [shape = 'u32[144,128]{1,0:T(1,128)}', space=vmem, size = 0x12000, scoped, tag = 'internal scratch']
  %s0 = inlined_call_operand.vmem [shape: f32[128,256], index: 0, kind: input, shape index: {}]
  %s1 = inlined_call_operand.vmem [shape: f32[256,128], index: 1, kind: input, shape index: {}]
  %s2 = inlined_call_operand.vmem [shape: f32[128,128], index: 2, kind: output, shape index: {}]
  %s3 = sld [smem:[#allocation0]]
  $region18: #{first_pooling.1} parent=0
    _
  %s5 = ssub.s32 1, %s3
  %s6 = scalar_select 0, %s5, %s3
  // Predicated region
  $region2: #{first_pooling.1} parent=0 // pred_check
    _
  $region3: #{first_pooling.1} parent=0 // pred_check_branch
    %8 = sbr.rel (0) target = $region5
  $region4: #{first_pooling.1} parent=0 // pred_region
    _
  $region5: #{first_pooling.1} parent=0 // pred_fallthru
    _
  // Predicated region
  $region6: #{first_pooling.1} parent=0 // pred_check
    _
  $region7: #{first_pooling.1} parent=0 // pred_check_branch
    %10 = sbr.rel (0) target = $region9
  $region8: #{first_pooling.1} parent=0 // pred_region
    _
  $region9: #{first_pooling.1} parent=0 // pred_fallthru
    _
  %v11 = vld [vmem:[%s0] sm:$0xff]
  %v12 = vld [vmem:[%s0 + $0x8] sm:$0xff]
  %v13 = vld [vmem:[%s0 + $0x10] sm:$0xff]
  %v14 = vld [vmem:[%s0 + $0x18] sm:$0xff]
  %v15 = vld [vmem:[%s0 + $0x20] sm:$0xff]
  %v16 = vld [vmem:[%s0 + $0x28] sm:$0xff]
  %v17 = vld [vmem:[%s0 + $0x30] sm:$0xff]
  %v18 = vld [vmem:[%s0 + $0x38] sm:$0xff]
  %v19 = vld [vmem:[%s0 + $0x40] sm:$0xff]
  %v20 = vld [vmem:[%s0 + $0x48] sm:$0xff]
  %v21 = vld [vmem:[%s0 + $0x50] sm:$0xff]
  %v22 = vld [vmem:[%s0 + $0x58] sm:$0xff]
  %v23 = vld [vmem:[%s0 + $0x60] sm:$0xff]
  %v24 = vld [vmem:[%s0 + $0x68] sm:$0xff]
  %v25 = vld [vmem:[%s0 + $0x70] sm:$0xff]
  %v26 = vld [vmem:[%s0 + $0x78] sm:$0xff]
  %v27 = vld [vmem:[%s0 + $0x80] sm:$0xff]
  %v28 = vld [vmem:[%s0 + $0x88] sm:$0xff]
  %v29 = vld [vmem:[%s0 + $0x90] sm:$0xff]
  %v30 = vld [vmem:[%s0 + $0x98] sm:$0xff]
  %v31 = vld [vmem:[%s0 + $0xa0] sm:$0xff]
  %v32 = vld [vmem:[%s0 + $0xa8] sm:$0xff]
  %v33 = vld [vmem:[%s0 + $0xb0] sm:$0xff]
  %v34 = vld [vmem:[%s0 + $0xb8] sm:$0xff]
  %v35 = vld [vmem:[%s0 + $0xc0] sm:$0xff]
  %v36 = vld [vmem:[%s0 + $0xc8] sm:$0xff]
  %v37 = vld [vmem:[%s0 + $0xd0] sm:$0xff]
  %v38 = vld [vmem:[%s0 + $0xd8] sm:$0xff]
  %v39 = vld [vmem:[%s0 + $0xe0] sm:$0xff]
  %v40 = vld [vmem:[%s0 + $0xe8] sm:$0xff]
  %v41 = vld [vmem:[%s0 + $0xf0] sm:$0xff]
  %v42 = vld [vmem:[%s0 + $0xf8] sm:$0xff]
  %v43 = vld [vmem:[%s1] sm:$0xff]
  %v44 = vld [vmem:[%s1 + $0x8] sm:$0xff]
  %v45 = vld [vmem:[%s1 + $0x10] sm:$0xff]
  %v46 = vld [vmem:[%s1 + $0x18] sm:$0xff]
  %v47 = vld [vmem:[%s1 + $0x20] sm:$0xff]
  %v48 = vld [vmem:[%s1 + $0x28] sm:$0xff]
  %v49 = vld [vmem:[%s1 + $0x30] sm:$0xff]
  %v50 = vld [vmem:[%s1 + $0x38] sm:$0xff]
  %v51 = vld [vmem:[%s1 + $0x40] sm:$0xff]
  %v52 = vld [vmem:[%s1 + $0x48] sm:$0xff]
  %v53 = vld [vmem:[%s1 + $0x50] sm:$0xff]
  %v54 = vld [vmem:[%s1 + $0x58] sm:$0xff]
  %v55 = vld [vmem:[%s1 + $0x60] sm:$0xff]
  %v56 = vld [vmem:[%s1 + $0x68] sm:$0xff]
  %v57 = vld [vmem:[%s1 + $0x70] sm:$0xff]
  %v58 = vld [vmem:[%s1 + $0x78] sm:$0xff]
  %v59 = vld [vmem:[%s1 + $0x80] sm:$0xff]
  %v60 = vld [vmem:[%s1 + $0x88] sm:$0xff]
  %v61 = vld [vmem:[%s1 + $0x90] sm:$0xff]
  %v62 = vld [vmem:[%s1 + $0x98] sm:$0xff]
  %v63 = vld [vmem:[%s1 + $0xa0] sm:$0xff]
  %v64 = vld [vmem:[%s1 + $0xa8] sm:$0xff]
  %v65 = vld [vmem:[%s1 + $0xb0] sm:$0xff]
  %v66 = vld [vmem:[%s1 + $0xb8] sm:$0xff]
  %v67 = vld [vmem:[%s1 + $0xc0] sm:$0xff]
  %v68 = vld [vmem:[%s1 + $0xc8] sm:$0xff]
  %v69 = vld [vmem:[%s1 + $0xd0] sm:$0xff]
  %v70 = vld [vmem:[%s1 + $0xd8] sm:$0xff]
  %v71 = vld [vmem:[%s1 + $0xe0] sm:$0xff]
  %v72 = vld [vmem:[%s1 + $0xe8] sm:$0xff]
  %v73 = vld [vmem:[%s1 + $0xf0] sm:$0xff]
  %v74 = vld [vmem:[%s1 + $0xf8] sm:$0xff]
  %75 = vmatprep.subr.mxu0 0.0
  %76 = vmatpush1.msra.mxu0 %v43
  %77 = vmatprep.subr.mxu0 0.0
  %78 = vmatpush1.msra.mxu0 %v44
  %79 = vmatprep.subr.mxu0 0.0
  %80 = vmatpush1.msra.mxu0 %v45
  %81 = vmatprep.subr.mxu0 0.0
  %82 = vmatpush1.msra.mxu0 %v46
  %83 = vmatprep.subr.mxu0 0.0
  %84 = vmatpush1.msra.mxu0 %v47
  %85 = vmatprep.subr.mxu0 0.0
  %86 = vmatpush1.msra.mxu0 %v48
  %87 = vmatprep.subr.mxu0 0.0
  %88 = vmatpush1.msra.mxu0 %v49
  %89 = vmatprep.subr.mxu0 0.0
  %90 = vmatpush1.msra.mxu0 %v50
  %91 = vmatprep.subr.mxu0 0.0
  %92 = vmatpush1.msra.mxu0 %v51
  %93 = vmatprep.subr.mxu0 0.0
  %94 = vmatpush1.msra.mxu0 %v52
  %95 = vmatprep.subr.mxu0 0.0
  %96 = vmatpush1.msra.mxu0 %v53
  %97 = vmatprep.subr.mxu0 0.0
  %98 = vmatpush1.msra.mxu0 %v54
  %99 = vmatprep.subr.mxu0 0.0
  %100 = vmatpush1.msra.mxu0 %v55
  %101 = vmatprep.subr.mxu0 0.0
  %102 = vmatpush1.msra.mxu0 %v56
  %103 = vmatprep.subr.mxu0 0.0
  %104 = vmatpush1.msra.mxu0 %v57
  %105 = vmatprep.subr.mxu0 0.0
  %106 = vmatpush1.msra.mxu0 %v58
  %107 = vmatprep.subr.mxu0 0.0
  %108 = vmatpush1.msra.mxu0 %v59
  %109 = vmatprep.subr.mxu0 0.0
  %110 = vmatpush1.msra.mxu0 %v60
  %111 = vmatprep.subr.mxu0 0.0
  %112 = vmatpush1.msra.mxu0 %v61
  %113 = vmatprep.subr.mxu0 0.0
  %114 = vmatpush1.msra.mxu0 %v62
  %115 = vmatprep.subr.mxu0 0.0
  %116 = vmatpush1.msra.mxu0 %v63
  %117 = vmatprep.subr.mxu0 0.0
  %118 = vmatpush1.msra.mxu0 %v64
  %119 = vmatprep.subr.mxu0 0.0
  %120 = vmatpush1.msra.mxu0 %v65
  %121 = vmatprep.subr.mxu0 0.0
  %122 = vmatpush1.msra.mxu0 %v66
  %123 = vmatprep.subr.mxu0 0.0
  %124 = vmatpush1.msra.mxu0 %v67
  %125 = vmatprep.subr.mxu0 0.0
  %126 = vmatpush1.msra.mxu0 %v68
  %127 = vmatprep.subr.mxu0 0.0
  %128 = vmatpush1.msra.mxu0 %v69
  %129 = vmatprep.subr.mxu0 0.0
  %130 = vmatpush1.msra.mxu0 %v70
  %131 = vmatprep.subr.mxu0 0.0
  %132 = vmatpush1.msra.mxu0 %v71
  %133 = vmatprep.subr.mxu0 0.0
  %134 = vmatpush1.msra.mxu0 %v72
  %135 = vmatprep.subr.mxu0 0.0
  %136 = vmatpush1.msra.mxu0 %v73
  %137 = vmatprep.subr.mxu0 0.0
  %138 = vmatpush1.msra.mxu0 %v74
  %139 = vmatprep.mubr.f32.mxu0 %v12
  %140 = vmatmul.mubr.f32.gmra.mrb[0].mxu0 %v11
  %v141 = vpop.f32.mrb[0].mxu0
  %v142 = vadd.f32 0.0, %v141
  %v143 = vpop.f32.mrb[0].mxu0
  %144 = vmatprep.mubr.f32.mxu0 %v14
  %145 = vmatmul.mubr.f32.gmra.mrb[0].mxu0 %v13
  %v146 = vpop.f32.mrb[0].mxu0
  %v147 = vadd.f32 0.0, %v146
  %v148 = vpop.f32.mrb[0].mxu0
  %149 = vmatprep.mubr.f32.mxu0 %v16
  %150 = vmatmul.mubr.f32.gmra.mrb[0].mxu0 %v15
  %v151 = vpop.f32.mrb[0].mxu0
  %v152 = vadd.f32 0.0, %v151
  %v153 = vpop.f32.mrb[0].mxu0
  %154 = vmatprep.mubr.f32.mxu0 %v18
  %155 = vmatmul.mubr.f32.gmra.mrb[0].mxu0 %v17
  %v156 = vpop.f32.mrb[0].mxu0
  %v157 = vadd.f32 0.0, %v156
  %v158 = vpop.f32.mrb[0].mxu0
  %159 = vmatprep.mubr.f32.mxu0 %v20
  %160 = vmatmul.mubr.f32.gmra.mrb[0].mxu0 %v19
  %v161 = vpop.f32.mrb[0].mxu0
  %v162 = vadd.f32 0.0, %v161
  %v163 = vpop.f32.mrb[0].mxu0
  %164 = vmatprep.mubr.f32.mxu0 %v22
  %165 = vmatmul.mubr.f32.gmra.mrb[0].mxu0 %v21
  %v166 = vpop.f32.mrb[0].mxu0
  %v167 = vadd.f32 0.0, %v166
  %v168 = vpop.f32.mrb[0].mxu0
  %169 = vmatprep.mubr.f32.mxu0 %v24
  %170 = vmatmul.mubr.f32.gmra.mrb[0].mxu0 %v23
  %v171 = vpop.f32.mrb[0].mxu0
  %v172 = vadd.f32 0.0, %v171
  %v173 = vpop.f32.mrb[0].mxu0
  %174 = vmatprep.mubr.f32.mxu0 %v26
  %175 = vmatmul.mubr.f32.gmra.mrb[0].mxu0 %v25
  %v176 = vpop.f32.mrb[0].mxu0
  %v177 = vadd.f32 0.0, %v176
  %v178 = vpop.f32.mrb[0].mxu0
  %179 = vmatprep.mubr.f32.mxu0 %v28
  %180 = vmatmul.mubr.f32.gmra.mrb[0].mxu0 %v27
  %v181 = vpop.f32.mrb[0].mxu0
  %v182 = vadd.f32 0.0, %v181
  %v183 = vpop.f32.mrb[0].mxu0
  %184 = vmatprep.mubr.f32.mxu0 %v30
  %185 = vmatmul.mubr.f32.gmra.mrb[0].mxu0 %v29
  %v186 = vpop.f32.mrb[0].mxu0
  %v187 = vadd.f32 0.0, %v186
  %v188 = vpop.f32.mrb[0].mxu0
  %189 = vmatprep.mubr.f32.mxu0 %v32
  %190 = vmatmul.mubr.f32.gmra.mrb[0].mxu0 %v31
  %v191 = vpop.f32.mrb[0].mxu0
  %v192 = vadd.f32 0.0, %v191
  %v193 = vpop.f32.mrb[0].mxu0
  %194 = vmatprep.mubr.f32.mxu0 %v34
  %195 = vmatmul.mubr.f32.gmra.mrb[0].mxu0 %v33
  %v196 = vpop.f32.mrb[0].mxu0
  %v197 = vadd.f32 0.0, %v196
  %v198 = vpop.f32.mrb[0].mxu0
  %199 = vmatprep.mubr.f32.mxu0 %v36
  %200 = vmatmul.mubr.f32.gmra.mrb[0].mxu0 %v35
  %v201 = vpop.f32.mrb[0].mxu0
  %v202 = vadd.f32 0.0, %v201
  %v203 = vpop.f32.mrb[0].mxu0
  %204 = vmatprep.mubr.f32.mxu0 %v38
  %205 = vmatmul.mubr.f32.gmra.mrb[0].mxu0 %v37
  %v206 = vpop.f32.mrb[0].mxu0
  %v207 = vadd.f32 0.0, %v206
  %v208 = vpop.f32.mrb[0].mxu0
  %209 = vmatprep.mubr.f32.mxu0 %v40
  %210 = vmatmul.mubr.f32.gmra.mrb[0].mxu0 %v39
  %v211 = vpop.f32.mrb[0].mxu0
  %v212 = vadd.f32 0.0, %v211
  %v213 = vpop.f32.mrb[0].mxu0
  %214 = vmatprep.mubr.f32.mxu0 %v42
  %215 = vmatmul.mubr.f32.gmra.mrb[0].mxu0 %v41
  %v216 = vpop.f32.mrb[0].mxu0
  %v217 = vadd.f32 0.0, %v216
  %v218 = vpop.f32.mrb[0].mxu0
  %219 = vdwg.mxu0
  %220 = vst [vmem:[%s2] sm:$0xff] %v142
  %221 = vst [vmem:[%s2 + $0x8] sm:$0xff] %v147
  %222 = vst [vmem:[%s2 + $0x10] sm:$0xff] %v152
  %223 = vst [vmem:[%s2 + $0x18] sm:$0xff] %v157
  %224 = vst [vmem:[%s2 + $0x20] sm:$0xff] %v162
  %225 = vst [vmem:[%s2 + $0x28] sm:$0xff] %v167
  %226 = vst [vmem:[%s2 + $0x30] sm:$0xff] %v172
  %227 = vst [vmem:[%s2 + $0x38] sm:$0xff] %v177
  %228 = vst [vmem:[%s2 + $0x40] sm:$0xff] %v182
  %229 = vst [vmem:[%s2 + $0x48] sm:$0xff] %v187
  %230 = vst [vmem:[%s2 + $0x50] sm:$0xff] %v192
  %231 = vst [vmem:[%s2 + $0x58] sm:$0xff] %v197
  %232 = vst [vmem:[%s2 + $0x60] sm:$0xff] %v202
  %233 = vst [vmem:[%s2 + $0x68] sm:$0xff] %v207
  %234 = vst [vmem:[%s2 + $0x70] sm:$0xff] %v212
  %235 = vst [vmem:[%s2 + $0x78] sm:$0xff] %v217
  // Predicated region
  $region10: #{first_pooling.1} parent=0 // pred_check
    _
  $region11: #{first_pooling.1} parent=0 // pred_check_branch
    %237 = sbr.rel (0) target = $region13
  $region12: #{first_pooling.1} parent=0 // pred_region
    _
  $region13: #{first_pooling.1} parent=0 // pred_fallthru
    _
  // Predicated region
  $region14: #{first_pooling.1} parent=0 // pred_check
    _
  $region15: #{first_pooling.1} parent=0 // pred_check_branch
    %239 = sbr.rel (0) target = $region17
  $region16: #{first_pooling.1} parent=0 // pred_region
    _
  $region17: #{first_pooling.1} parent=0 // pred_fallthru
    _

</llo_original>
